<compile_context>
chip_gen: v7x
topology: tpu7x:2x2x1
jax: 0.10.0
libtpu: 0.0.40
codegen_flags: <defaults>
</compile_context>

<pallas_src>
import functools
import math

import numpy as np
import jax
import jax.numpy as jnp
from jax.experimental import pallas as pl
from jax.experimental.pallas import tpu as pltpu

_INV_SQRT2 = 1.0 / math.sqrt(2.0)
_MIB = 1024 * 1024


def _gelu_exact(x):
    # PyTorch nn.GELU() default = exact erf formulation (kept in f32).
    return 0.5 * x * (1.0 + jax.lax.erf(x * _INV_SQRT2))


def _mlp_block(x, w1_ref, b1_ref, w2_ref, sub, compute_dtype):
    """GELU(x @ W1[:,chunk] + b1[chunk]) @ W2[chunk,:], summed over static
    hidden sub-chunks.  Returns an f32 (tile_m, Cout) partial sum (no b2)."""
    xc = x.astype(compute_dtype)
    acc = None
    for (s0, sz) in sub:  # static unroll: lets MXU pushes overlap GELU VALU work
        w1c = w1_ref[:, s0:s0 + sz].astype(compute_dtype)
        h = jnp.dot(xc, w1c, preferred_element_type=jnp.float32)
        h = _gelu_exact(h + b1_ref[:, s0:s0 + sz])
        w2c = w2_ref[s0:s0 + sz, :].astype(compute_dtype)
        p = jnp.dot(h.astype(compute_dtype), w2c,
                    preferred_element_type=jnp.float32)
        acc = p if acc is None else acc + p
    return acc


def mlp_resident_kernel(x_ref, w1_ref, b1_ref, w2_ref, b2_ref, o_ref,
                        *, sub, compute_dtype):
    """Resident-weight path: 1-D grid over token tiles; weights live in VMEM."""
    acc = _mlp_block(x_ref[...], w1_ref, b1_ref, w2_ref, sub, compute_dtype)
    o_ref[...] = (acc + b2_ref[...]).astype(o_ref.dtype)


def mlp_chunked_kernel(x_ref, w1_ref, b1_ref, w2_ref, b2_ref, o_ref,
                       *, sub, compute_dtype):
    """Fallback: hidden dim chunked on a trailing reduction grid axis;
    accumulates directly into the (revisited) f32 output block."""
    k = pl.program_id(1)

    @pl.when(k == 0)
    def _init():
        o_ref[...] = jnp.broadcast_to(b2_ref[...], o_ref.shape).astype(o_ref.dtype)

    acc = _mlp_block(x_ref[...], w1_ref, b1_ref, w2_ref, sub, compute_dtype)
    o_ref[...] += acc


def _round_up(x, m):
    return ((x + m - 1) // m) * m


def _choose_tile_m(M):
    # Large, aligned token tiles => better weight reuse; keep >=2 tiles when
    # possible so both TensorCores (v7x megacore) have parallel work.
    if M >= 1024:
        return 512
    if M >= 512:
        return 256
    if M >= 16:
        return _round_up((M + 1) // 2, 8)
    return _round_up(max(M, 1), 8)


def _choose_tile_h(H):
    # Hidden chunk must be a multiple of 128 (lane / MXU alignment) or H itself.
    for th in (512, 384, 256, 128):
        if H % th == 0:
            return th
    return H


def _subchunks(total, size):
    size = max(1, min(int(size), int(total)))
    chunks, s = [], 0
    while s < total:
        sz = min(size, total - s)
        chunks.append((s, sz))
        s += sz
    return tuple(chunks)


def _vmem_cap_bytes():
    try:
        cap = getattr(pltpu.get_tpu_info(), "vmem_capacity_bytes", None)
        if cap:
            return int(cap)
    except Exception:
        pass
    return 64 * _MIB  # conservative default (v7x per-TensorCore VMEM)


def mlp_forward(x, w1, b1, w2, b2, *, tile_m=None, tile_h=None,
                compute_dtype=jnp.bfloat16, force_chunked=False):
    """x: (..., C); w1: (C, H); b1: (H,)/(1,H); w2: (H, Cout); b2: (Cout,)/(1,Cout).

    Weights are expected pre-transposed as (in_features, out_features), so the
    kernel computes y = x @ W + b, matching PyTorch's x @ W.T + b.
    """
    orig_shape = x.shape
    C = orig_shape[-1]
    M = int(np.prod(orig_shape[:-1])) if len(orig_shape) > 1 else 1
    H = w1.shape[1]
    Cout = w2.shape[1]
    out_dtype = x.dtype

    x2 = x.reshape(M, C)

    if tile_m is None:
        tile_m = _choose_tile_m(M)
    tile_m = max(8, _round_up(int(tile_m), 8))
    M_pad = _round_up(M, tile_m)
    if M_pad != M:
        x2 = jnp.pad(x2, ((0, M_pad - M), (0, 0)))

    if tile_h is None:
        tile_h = _choose_tile_h(H)
    tile_h = int(tile_h)

    # Cast weights once in the wrapper: bf16 weights halve HBM weight traffic
    # and feed the MXU at native rate.  Biases stay f32 (VPU add + GELU in f32).
    w1c = w1.astype(compute_dtype)
    w2c = w2.astype(compute_dtype)
    b1c = jnp.asarray(b1, jnp.float32).reshape(1, H)
    b2c = jnp.asarray(b2, jnp.float32).reshape(1, Cout)

    xb = x2.dtype.itemsize
    wb = jnp.dtype(compute_dtype).itemsize
    ob = jnp.dtype(out_dtype).itemsize
    cap = max(_vmem_cap_bytes(), 32 * _MIB)

    # Resident-weight VMEM estimate (double-buffered blocks + live intermediates).
    est_res = (2 * tile_m * C * xb
               + 2 * (C * H + H * Cout) * wb
               + 2 * (H + Cout) * 4
               + 2 * tile_m * Cout * ob
               + 4 * tile_m * (min(tile_h, H) + Cout))
    use_resident = (not force_chunked) and (est_res <= cap - 16 * _MIB)

    if use_resident:
        sub = _subchunks(H, tile_h)
        vmem_limit = int(max(16 * _MIB,
                             min(cap - 4 * _MIB, max(int(est_res * 1.5), 32 * _MIB))))
        kernel = functools.partial(mlp_resident_kernel, sub=sub,
                                   compute_dtype=compute_dtype)
        out = pl.pallas_call(
            kernel,
            out_shape=jax.ShapeDtypeStruct((M_pad, Cout), out_dtype),
            grid_spec=pltpu.PrefetchScalarGridSpec(
                num_scalar_prefetch=0,
                grid=(M_pad // tile_m,),
                in_specs=[
                    pl.BlockSpec((tile_m, C), lambda i: (i, 0)),   # x token tile
                    pl.BlockSpec((C, H), lambda i: (0, 0)),        # W1 (resident)
                    pl.BlockSpec((1, H), lambda i: (0, 0)),        # b1 (resident)
                    pl.BlockSpec((H, Cout), lambda i: (0, 0)),     # W2 (resident)
                    pl.BlockSpec((1, Cout), lambda i: (0, 0)),     # b2 (resident)
                ],
                out_specs=pl.BlockSpec((tile_m, Cout), lambda i: (i, 0)),
            ),
            compiler_params=pltpu.CompilerParams(
                dimension_semantics=("parallel",),
                vmem_limit_bytes=vmem_limit,
            ),
        )(x2, w1c, b1c, w2c, b2c)
    else:
        # Hidden-dim reduction on a trailing "arbitrary" grid axis.
        if tile_h != H and (H % tile_h != 0 or tile_h % 128 != 0):
            tile_h = _choose_tile_h(H)
            if H % tile_h != 0:
                tile_h = H
        sub_sz = tile_h // 2 if (tile_h % 256 == 0) else tile_h
        sub = _subchunks(tile_h, sub_sz)
        est_chk = (2 * tile_m * C * xb
                   + 2 * (C * tile_h + tile_h * Cout) * wb
                   + 2 * (tile_h + Cout) * 4
                   + 2 * tile_m * Cout * 4
                   + 4 * tile_m * (tile_h + Cout))
        vmem_limit = int(max(16 * _MIB,
                             min(cap - 4 * _MIB, max(int(est_chk * 1.5), 32 * _MIB))))
        kernel = functools.partial(mlp_chunked_kernel, sub=sub,
                                   compute_dtype=compute_dtype)
        out = pl.pallas_call(
            kernel,
            out_shape=jax.ShapeDtypeStruct((M_pad, Cout), jnp.float32),
            grid_spec=pltpu.PrefetchScalarGridSpec(
                num_scalar_prefetch=0,
                grid=(M_pad // tile_m, H // tile_h),
                in_specs=[
                    pl.BlockSpec((tile_m, C), lambda i, k: (i, 0)),    # x (resident over k)
                    pl.BlockSpec((C, tile_h), lambda i, k: (0, k)),    # W1 chunk
                    pl.BlockSpec((1, tile_h), lambda i, k: (0, k)),    # b1 chunk
                    pl.BlockSpec((tile_h, Cout), lambda i, k: (k, 0)), # W2 chunk
                    pl.BlockSpec((1, Cout), lambda i, k: (0, 0)),      # b2
                ],
                out_specs=pl.BlockSpec((tile_m, Cout), lambda i, k: (i, 0)),
            ),
            compiler_params=pltpu.CompilerParams(
                dimension_semantics=("parallel", "arbitrary"),
                vmem_limit_bytes=vmem_limit,
            ),
        )(x2, w1c, b1c, w2c, b2c)
        out = out.astype(out_dtype)

    if M_pad != M:
        out = out[:M]
    # TODO(synk): nn.Dropout omitted — drop=0.0 default / inference no-op.
    return out.reshape(orig_shape[:-1] + (Cout,))


def reference_mlp(x, w1, b1, w2, b2):
    h = _gelu_exact(x @ w1 + b1)
    return h @ w2 + b2


if __name__ == "__main__":
    # Small but lane-aligned shapes: (B, N, C) tokens, hidden = 4*C.
    B, N, C = 2, 8, 128
    H = 4 * C  # 512

    key = jax.random.PRNGKey(0)
    ks = jax.random.split(key, 5)
    x = jax.random.normal(ks[0], (B, N, C), jnp.float32)

    w1 = 0.05 * jax.random.normal(ks[1], (C, H), jnp.float32)   # fc1 weight (pre-transposed)
    b1 = 0.01 * jax.random.normal(ks[2], (1, H), jnp.float32)   # fc1 bias
    w2 = 0.05 * jax.random.normal(ks[3], (H, C), jnp.float32)   # fc2 weight (pre-transposed)
    b2 = 0.01 * jax.random.normal(ks[4], (1, C), jnp.float32)   # fc2 bias

    ref = reference_mlp(x, w1, b1, w2, b2)

    # 1) Default bf16-MXU, resident-weight path (2 token tiles x 2 hidden
    #    sub-chunks).  Looser tolerance for bf16 input rounding.
    out_bf16 = jax.block_until_ready(mlp_forward(x, w1, b1, w2, b2, tile_h=256))
    np.testing.assert_allclose(np.asarray(out_bf16), np.asarray(ref),
                               atol=3e-2, rtol=3e-2)

    # 2) f32 resident path — strict structural check.
    out_f32 = jax.block_until_ready(
        mlp_forward(x, w1, b1, w2, b2, tile_h=256, compute_dtype=jnp.float32))
    np.testing.assert_allclose(np.asarray(out_f32), np.asarray(ref),
                               atol=1e-4, rtol=1e-4)

    # 3) Chunked (grid-reduction) fallback path, f32 — strict check.
    out_chk = jax.block_until_ready(
        mlp_forward(x, w1, b1, w2, b2, tile_m=8, tile_h=256,
                    compute_dtype=jnp.float32, force_chunked=True))
    np.testing.assert_allclose(np.asarray(out_chk), np.asarray(ref),
                               atol=1e-4, rtol=1e-4)

    print("KERNEL_OK")
</pallas_src>

<mosaic_0001>
module attributes {stable_mosaic.version = 11 : i64} {
  func.func @mlp_resident_kernel(%arg0: i32, %arg1: memref<8x128xf32, #tpu.memory_space<vmem>>, %arg2: memref<128x512xbf16, #tpu.memory_space<vmem>>, %arg3: memref<1x512xf32, #tpu.memory_space<vmem>>, %arg4: memref<512x128xbf16, #tpu.memory_space<vmem>>, %arg5: memref<1x128xf32, #tpu.memory_space<vmem>>, %arg6: memref<8x128xf32, #tpu.memory_space<vmem>>) attributes {dimension_semantics = [#tpu.dimension_semantics<parallel>], iteration_bounds = array<i64: 2>, scalar_prefetch = 0 : i64, scratch_operands = 0 : i64, tpu.core_type = #tpu.core_type<tc>, window_params = [{transform_indices = @transform_0, window_bounds = array<i64: 8, 128>}, {pipeline_mode = #tpu.pipeline_mode<synchronous>, transform_indices = @transform_1, window_bounds = array<i64: 128, 512>}, {pipeline_mode = #tpu.pipeline_mode<synchronous>, transform_indices = @transform_2, window_bounds = array<i64: 1, 512>}, {pipeline_mode = #tpu.pipeline_mode<synchronous>, transform_indices = @transform_3, window_bounds = array<i64: 512, 128>}, {pipeline_mode = #tpu.pipeline_mode<synchronous>, transform_indices = @transform_4, window_bounds = array<i64: 1, 128>}, {transform_indices = @transform_5, window_bounds = array<i64: 8, 128>}]} {
    %c0 = arith.constant 0 : index
    %c0_0 = arith.constant 0 : index
    %0 = vector.load %arg1[%c0, %c0_0] : memref<8x128xf32, #tpu.memory_space<vmem>>, vector<8x128xf32>
    %1 = arith.truncf %0 : vector<8x128xf32> to vector<8x128xbf16>
    %c0_1 = arith.constant 0 : index
    %c0_2 = arith.constant 0 : index
    %2 = vector.load %arg2[%c0_1, %c0_2] : memref<128x512xbf16, #tpu.memory_space<vmem>>, vector<128x256xbf16>
    %cst = arith.constant dense<0.000000e+00> : vector<8x256xf32>
    %3 = tpu.matmul %1, %2, %cst {dimension_numbers = #tpu.dot_dimension_numbers<[1], [0], [0], [1], [0, 0, 1, 1], [], []>} : vector<8x128xbf16>, vector<128x256xbf16>, vector<8x256xf32> -> vector<8x256xf32>
    %c0_3 = arith.constant 0 : index
    %c0_4 = arith.constant 0 : index
    %4 = vector.load %arg3[%c0_3, %c0_4] : memref<1x512xf32, #tpu.memory_space<vmem>>, vector<1x256xf32>
    %5 = vector.broadcast %4 : vector<1x256xf32> to vector<8x256xf32>
    %6 = arith.addf %3, %5 : vector<8x256xf32>
    %cst_5 = arith.constant 5.000000e-01 : f32
    %7 = vector.broadcast %cst_5 : f32 to vector<8x256xf32>
    %8 = arith.mulf %7, %6 : vector<8x256xf32>
    %cst_6 = arith.constant 0.707106769 : f32
    %9 = vector.broadcast %cst_6 : f32 to vector<8x256xf32>
    %10 = arith.mulf %6, %9 : vector<8x256xf32>
    %11 = math.erf %10 : vector<8x256xf32>
    %cst_7 = arith.constant 1.000000e+00 : f32
    %12 = vector.broadcast %cst_7 : f32 to vector<8x256xf32>
    %13 = arith.addf %12, %11 : vector<8x256xf32>
    %14 = arith.mulf %8, %13 : vector<8x256xf32>
    %c0_8 = arith.constant 0 : index
    %c0_9 = arith.constant 0 : index
    %15 = vector.load %arg4[%c0_8, %c0_9] : memref<512x128xbf16, #tpu.memory_space<vmem>>, vector<256x128xbf16>
    %16 = arith.truncf %14 : vector<8x256xf32> to vector<8x256xbf16>
    %cst_10 = arith.constant dense<0.000000e+00> : vector<8x128xf32>
    %17 = tpu.matmul %16, %15, %cst_10 {dimension_numbers = #tpu.dot_dimension_numbers<[1], [0], [0], [1], [0, 0, 1, 1], [], []>} : vector<8x256xbf16>, vector<256x128xbf16>, vector<8x128xf32> -> vector<8x128xf32>
    %c0_11 = arith.constant 0 : index
    %c256 = arith.constant 256 : index
    %18 = vector.load %arg2[%c0_11, %c256] : memref<128x512xbf16, #tpu.memory_space<vmem>>, vector<128x256xbf16>
    %cst_12 = arith.constant dense<0.000000e+00> : vector<8x256xf32>
    %19 = tpu.matmul %1, %18, %cst_12 {dimension_numbers = #tpu.dot_dimension_numbers<[1], [0], [0], [1], [0, 0, 1, 1], [], []>} : vector<8x128xbf16>, vector<128x256xbf16>, vector<8x256xf32> -> vector<8x256xf32>
    %c0_13 = arith.constant 0 : index
    %c256_14 = arith.constant 256 : index
    %20 = vector.load %arg3[%c0_13, %c256_14] : memref<1x512xf32, #tpu.memory_space<vmem>>, vector<1x256xf32>
    %21 = vector.broadcast %20 : vector<1x256xf32> to vector<8x256xf32>
    %22 = arith.addf %19, %21 : vector<8x256xf32>
    %cst_15 = arith.constant 5.000000e-01 : f32
    %23 = vector.broadcast %cst_15 : f32 to vector<8x256xf32>
    %24 = arith.mulf %23, %22 : vector<8x256xf32>
    %cst_16 = arith.constant 0.707106769 : f32
    %25 = vector.broadcast %cst_16 : f32 to vector<8x256xf32>
    %26 = arith.mulf %22, %25 : vector<8x256xf32>
    %27 = math.erf %26 : vector<8x256xf32>
    %cst_17 = arith.constant 1.000000e+00 : f32
    %28 = vector.broadcast %cst_17 : f32 to vector<8x256xf32>
    %29 = arith.addf %28, %27 : vector<8x256xf32>
    %30 = arith.mulf %24, %29 : vector<8x256xf32>
    %c256_18 = arith.constant 256 : index
    %c0_19 = arith.constant 0 : index
    %31 = vector.load %arg4[%c256_18, %c0_19] : memref<512x128xbf16, #tpu.memory_space<vmem>>, vector<256x128xbf16>
    %32 = arith.truncf %30 : vector<8x256xf32> to vector<8x256xbf16>
    %cst_20 = arith.constant dense<0.000000e+00> : vector<8x128xf32>
    %33 = tpu.matmul %32, %31, %cst_20 {dimension_numbers = #tpu.dot_dimension_numbers<[1], [0], [0], [1], [0, 0, 1, 1], [], []>} : vector<8x256xbf16>, vector<256x128xbf16>, vector<8x128xf32> -> vector<8x128xf32>
    %34 = arith.addf %17, %33 : vector<8x128xf32>
    %c0_21 = arith.constant 0 : index
    %c0_22 = arith.constant 0 : index
    %35 = vector.load %arg5[%c0_21, %c0_22] : memref<1x128xf32, #tpu.memory_space<vmem>>, vector<1x128xf32>
    %36 = vector.broadcast %35 : vector<1x128xf32> to vector<8x128xf32>
    %37 = arith.addf %34, %36 : vector<8x128xf32>
    %c0_23 = arith.constant 0 : index
    %c0_24 = arith.constant 0 : index
    %38 = vector.load %arg6[%c0_23, %c0_24] : memref<8x128xf32, #tpu.memory_space<vmem>>, vector<8x128xf32>
    tpu.vector_store %arg6[%c0_23, %c0_24], %37 {strides = array<i32>} : memref<8x128xf32, #tpu.memory_space<vmem>>, vector<8x128xf32>,
    return
  }
  func.func @transform_0(%arg0: i32) -> (i32, i32) {
    %c0_i32 = arith.constant 0 : i32
    %c0_i32_0 = arith.constant 0 : i32
    return %arg0, %c0_i32 : i32, i32
  }
  func.func @transform_1(%arg0: i32) -> (i32, i32) {
    %c0_i32 = arith.constant 0 : i32
    %c0_i32_0 = arith.constant 0 : i32
    %c0_i32_1 = arith.constant 0 : i32
    return %c0_i32, %c0_i32_0 : i32, i32
  }
  func.func @transform_2(%arg0: i32) -> (i32, i32) {
    %c0_i32 = arith.constant 0 : i32
    %c0_i32_0 = arith.constant 0 : i32
    %c0_i32_1 = arith.constant 0 : i32
    return %c0_i32, %c0_i32_0 : i32, i32
  }
  func.func @transform_3(%arg0: i32) -> (i32, i32) {
    %c0_i32 = arith.constant 0 : i32
    %c0_i32_0 = arith.constant 0 : i32
    %c0_i32_1 = arith.constant 0 : i32
    return %c0_i32, %c0_i32_0 : i32, i32
  }
  func.func @transform_4(%arg0: i32) -> (i32, i32) {
    %c0_i32 = arith.constant 0 : i32
    %c0_i32_0 = arith.constant 0 : i32
    %c0_i32_1 = arith.constant 0 : i32
    return %c0_i32, %c0_i32_0 : i32, i32
  }
  func.func @transform_5(%arg0: i32) -> (i32, i32) {
    %c0_i32 = arith.constant 0 : i32
    %c0_i32_0 = arith.constant 0 : i32
    return %arg0, %c0_i32 : i32, i32
  }
}

</mosaic_0001>

<llo_original>
// kernel: tpu_custom_call.1
$region0: #{tpu_custom_call.1}
  #allocation0 [shape = 'u32[]', space=smem, size = 0x4, offset = 0x4, fixed_abs, tag = 'smem constant byte address 0x4 - core index']
  #allocation1 [shape = 'u32[144,128]{1,0:T(1,128)}', space=vmem, size = 0x12000, scoped, tag = 'internal scratch']
  %s0 = inlined_call_operand.hbm [shape: f32[16,128], index: 0, kind: input, shape index: {}]
  %s1 = inlined_call_operand.hbm [shape: bf16[128,512], index: 1, kind: input, shape index: {}]
  %s2 = inlined_call_operand.vmem [shape: f32[1,512], index: 2, kind: input, shape index: {}]
  %s3 = inlined_call_operand.hbm [shape: bf16[512,128], index: 3, kind: input, shape index: {}]
  %s4 = inlined_call_operand.vmem [shape: f32[1,128], index: 4, kind: input, shape index: {}]
  %s5 = inlined_call_operand.hbm [shape: f32[16,128], index: 5, kind: output, shape index: {}]
  %s6 = sld [smem:[#allocation0]]
  $region65: #{tpu_custom_call.1} parent=0
    _
  %s8 = ssub.s32 1, %s6
  %s9 = scalar_select 0, %s8, %s6
  $region1: #{tpu_custom_call.1} parent=0
    #allocation2 [shape = 'u8[8192]{0}', space=vmem, size = 0x2000, scoped, tag = 'input window, operand 0']
    #allocation3 [shape = 's32[2]{0}', space=sflag, size = 0x8, scoped, tag = 'scoped memory for tpu_custom_call.1']
    #allocation4 [shape = 's32[2]{0}', space=sflag, size = 0x8, scoped, tag = 'scoped memory for tpu_custom_call.1']
    #allocation5 [shape = 'u8[131072]{0}', space=vmem, size = 0x20000, scoped, tag = 'input window, operand 1, single buffered']
    #allocation6 [shape = 's32[1]{0}', space=sflag, size = 0x4, scoped, tag = 'scoped memory for tpu_custom_call.1']
    #allocation7 [shape = 'u8[131072]{0}', space=vmem, size = 0x20000, scoped, tag = 'input window, operand 3, single buffered']
    #allocation8 [shape = 'u8[8192]{0}', space=vmem, size = 0x2000, scoped, tag = 'output window, operand 0']
    %10 = vsyncpa [#allocation3], 0
    %s11 = scalar_lea.sflag [#allocation3], 1
    %12 = vsyncpa %s11, 0
    %13 = vsyncpa [#allocation6], 0
    %14 = vsyncpa [#allocation4], 0
    %s15 = scalar_lea.sflag [#allocation4], 1
    %16 = vsyncpa %s15, 0
    loop: start=0, step=1, limit=4
    $region2: #{tpu_custom_call.1} parent=1 // loop_pre_header
      _
    $region3: #{tpu_custom_call.1} parent=1 // loop_header
      %s18 = sphi 0, %s22
      %p19 = scmp.ge.s32.totalorder %s18, 4
      %s28 = sphi 0, %s30
      %s31 = sphi 0, %s28
      %s32 = sphi 0, %s31
      %s48 = sphi 0, %s32
      %s52 = sphi 0, %s52
      %s54 = sphi 0, %s52
      %s55 = sphi 0, %s54
      %s69 = sphi 0, %s55
      %s73 = sphi 0, %s73
      %s75 = sphi 0, %s73
      %s76 = sphi 0, %s75
      %s90 = sphi 0, %s76
      %s94 = sphi 0, %s94
      %s96 = sphi 0, %s94
      %s97 = sphi 0, %s96
      %s111 = sphi 0, %s97
      %s115 = sphi 0, %s115
      %s117 = sphi 0, %s115
      %s118 = sphi 0, %s117
      %s132 = sphi 0, %s118
      %s138 = sphi 0, %s140
      %s141 = sphi 0, %s138
      %s142 = sphi 0, %s141
      %s158 = sphi 0, %s142
    $region4: #{tpu_custom_call.1} parent=1 // loop_header_branch
      %21 = sbr.rel (%p19) target = $region8
    $region5: #{tpu_custom_call.1} parent=1 // loop_body
      %s23 = ssub.s32 %s18, 1
      %s24 = ssub.s32 %s18, 2
      %s25 = sadd.s32 %s18, 1
      %s26 = ssub.s32 %s18, %s25
      %p27 = scmp.eq.s32.totalorder %s26, 0
      %s29 = sadd.s32 %s28, 1
      %s30 = scalar_select %p27, %s28, %s29
      %p33 = pneg %p27
      %p34 = scmp.eq.s32.totalorder %s18, 1
      %p35 = por %p33, %p34
      %p36 = scmp.ne.s32.totalorder %s28, %s31
      %p37 = scmp.eq.s32.totalorder %s18, 0
      %p38 = por %p36, %p37
      %p39 = scmp.ne.s32.totalorder %s28, %s31
      %p40 = scmp.eq.s32.totalorder %s23, 1
      %p41 = por %p39, %p40
      %p42 = scmp.ne.s32.totalorder %s31, %s32
      %p43 = scmp.eq.s32.totalorder %s23, 0
      %p44 = por %p42, %p43
      %p45 = scmp.ne.s32.totalorder %s31, %s32
      %p46 = scmp.eq.s32.totalorder %s24, 1
      %p47 = por %p45, %p46
      %p49 = scmp.ne.s32.totalorder %s32, %s48
      %p50 = scmp.eq.s32.totalorder %s24, 0
      %p51 = por %p49, %p50
      %s53 = sadd.s32 %s52, 1
      %p56 = scmp.eq.s32.totalorder %s18, 1
      %p57 = scmp.ne.s32.totalorder %s52, %s54
      %p58 = scmp.eq.s32.totalorder %s18, 0
      %p59 = por %p57, %p58
      %p60 = scmp.ne.s32.totalorder %s52, %s54
      %p61 = scmp.eq.s32.totalorder %s23, 1
      %p62 = por %p60, %p61
      %p63 = scmp.ne.s32.totalorder %s54, %s55
      %p64 = scmp.eq.s32.totalorder %s23, 0
      %p65 = por %p63, %p64
      %p66 = scmp.ne.s32.totalorder %s54, %s55
      %p67 = scmp.eq.s32.totalorder %s24, 1
      %p68 = por %p66, %p67
      %p70 = scmp.ne.s32.totalorder %s55, %s69
      %p71 = scmp.eq.s32.totalorder %s24, 0
      %p72 = por %p70, %p71
      %s74 = sadd.s32 %s73, 1
      %p77 = scmp.eq.s32.totalorder %s18, 1
      %p78 = scmp.ne.s32.totalorder %s73, %s75
      %p79 = scmp.eq.s32.totalorder %s18, 0
      %p80 = por %p78, %p79
      %p81 = scmp.ne.s32.totalorder %s73, %s75
      %p82 = scmp.eq.s32.totalorder %s23, 1
      %p83 = por %p81, %p82
      %p84 = scmp.ne.s32.totalorder %s75, %s76
      %p85 = scmp.eq.s32.totalorder %s23, 0
      %p86 = por %p84, %p85
      %p87 = scmp.ne.s32.totalorder %s75, %s76
      %p88 = scmp.eq.s32.totalorder %s24, 1
      %p89 = por %p87, %p88
      %p91 = scmp.ne.s32.totalorder %s76, %s90
      %p92 = scmp.eq.s32.totalorder %s24, 0
      %p93 = por %p91, %p92
      %s95 = sadd.s32 %s94, 1
      %p98 = scmp.eq.s32.totalorder %s18, 1
      %p99 = scmp.ne.s32.totalorder %s94, %s96
      %p100 = scmp.eq.s32.totalorder %s18, 0
      %p101 = por %p99, %p100
      %p102 = scmp.ne.s32.totalorder %s94, %s96
      %p103 = scmp.eq.s32.totalorder %s23, 1
      %p104 = por %p102, %p103
      %p105 = scmp.ne.s32.totalorder %s96, %s97
      %p106 = scmp.eq.s32.totalorder %s23, 0
      %p107 = por %p105, %p106
      %p108 = scmp.ne.s32.totalorder %s96, %s97
      %p109 = scmp.eq.s32.totalorder %s24, 1
      %p110 = por %p108, %p109
      %p112 = scmp.ne.s32.totalorder %s97, %s111
      %p113 = scmp.eq.s32.totalorder %s24, 0
      %p114 = por %p112, %p113
      %s116 = sadd.s32 %s115, 1
      %p119 = scmp.eq.s32.totalorder %s18, 1
      %p120 = scmp.ne.s32.totalorder %s115, %s117
      %p121 = scmp.eq.s32.totalorder %s18, 0
      %p122 = por %p120, %p121
      %p123 = scmp.ne.s32.totalorder %s115, %s117
      %p124 = scmp.eq.s32.totalorder %s23, 1
      %p125 = por %p123, %p124
      %p126 = scmp.ne.s32.totalorder %s117, %s118
      %p127 = scmp.eq.s32.totalorder %s23, 0
      %p128 = por %p126, %p127
      %p129 = scmp.ne.s32.totalorder %s117, %s118
      %p130 = scmp.eq.s32.totalorder %s24, 1
      %p131 = por %p129, %p130
      %p133 = scmp.ne.s32.totalorder %s118, %s132
      %p134 = scmp.eq.s32.totalorder %s24, 0
      %p135 = por %p133, %p134
      %s136 = ssub.s32 %s18, %s25
      %p137 = scmp.eq.s32.totalorder %s136, 0
      %s139 = sadd.s32 %s138, 1
      %s140 = scalar_select %p137, %s138, %s139
      %p143 = pneg %p137
      %p144 = scmp.eq.s32.totalorder %s18, 1
      %p145 = por %p143, %p144
      %p146 = scmp.ne.s32.totalorder %s138, %s141
      %p147 = scmp.eq.s32.totalorder %s18, 0
      %p148 = por %p146, %p147
      %p149 = scmp.ne.s32.totalorder %s138, %s141
      %p150 = scmp.eq.s32.totalorder %s23, 1
      %p151 = por %p149, %p150
      %p152 = scmp.ne.s32.totalorder %s141, %s142
      %p153 = scmp.eq.s32.totalorder %s23, 0
      %p154 = por %p152, %p153
      %p155 = scmp.ne.s32.totalorder %s141, %s142
      %p156 = scmp.eq.s32.totalorder %s24, 1
      %p157 = por %p155, %p156
      %p159 = scmp.ne.s32.totalorder %s142, %s158
      %p160 = scmp.eq.s32.totalorder %s24, 0
      %p161 = por %p159, %p160
      %p162 = scmp.le.s32.totalorder 1, %s18
      %p163 = scmp.lt.s32.totalorder %s18, 3
      %p164 = pnand %p162, %p163
      %p165 = pneg %p164
      // Predicated region
      $region9: #{tpu_custom_call.1} parent=5 // pred_check
        _
      $region10: #{tpu_custom_call.1} parent=5 // pred_check_branch
        %167 = sbr.rel (%p164) target = $region12
      $region11: #{tpu_custom_call.1} parent=5 // pred_region
        %s168 = ssub.s32 %s18, 1
        // Predicated region
        $region13: #{tpu_custom_call.1} parent=11 // pred_check
          %p169 = pneg %p65
        $region14: #{tpu_custom_call.1} parent=11 // pred_check_branch
          %171 = sbr.rel (%p169) target = $region16
        $region15: #{tpu_custom_call.1} parent=11 // pred_region
          %s173 = ssub.s32 4096, 4096
          %174 = vsyncadd [#allocation6], %s173
          %s175 = sshll.u32 [#allocation5], 4
          %s176 = int_to_ptr.vmem [resolvable:$true] %s175
          %181 = dma.hbm_to_vmem [thread:$0]  %s1, 4096, %s176, [#allocation6], 256, 256, 16
        $region16: #{tpu_custom_call.1} parent=11 // pred_fallthru
          _
        // Predicated region
        $region17: #{tpu_custom_call.1} parent=11 // pred_check
          %p182 = pneg %p86
        $region18: #{tpu_custom_call.1} parent=11 // pred_check_branch
          %184 = sbr.rel (%p182) target = $region20
        $region19: #{tpu_custom_call.1} parent=11 // pred_region
          _
        $region20: #{tpu_custom_call.1} parent=11 // pred_fallthru
          _
        // Predicated region
        $region21: #{tpu_custom_call.1} parent=11 // pred_check
          %p185 = pneg %p107
        $region22: #{tpu_custom_call.1} parent=11 // pred_check_branch
          %187 = sbr.rel (%p185) target = $region24
        $region23: #{tpu_custom_call.1} parent=11 // pred_region
          %s189 = ssub.s32 4096, 4096
          %190 = vsyncadd [#allocation6], %s189
          %s191 = sshll.u32 [#allocation7], 4
          %s192 = int_to_ptr.vmem [resolvable:$true] %s191
          %197 = dma.hbm_to_vmem [thread:$0]  %s3, 4096, %s192, [#allocation6], 64, 64, 4
        $region24: #{tpu_custom_call.1} parent=11 // pred_fallthru
          _
        // Predicated region
        $region25: #{tpu_custom_call.1} parent=11 // pred_check
          %p198 = pneg %p128
        $region26: #{tpu_custom_call.1} parent=11 // pred_check_branch
          %200 = sbr.rel (%p198) target = $region28
        $region27: #{tpu_custom_call.1} parent=11 // pred_region
          _
        $region28: #{tpu_custom_call.1} parent=11 // pred_fallthru
          _
      $region12: #{tpu_custom_call.1} parent=5 // pred_fallthru
        _
      %p201 = scmp.lt.s32.totalorder %s18, 2
      // Predicated region
      $region29: #{tpu_custom_call.1} parent=5 // pred_check
        %p202 = pneg %p201
      $region30: #{tpu_custom_call.1} parent=5 // pred_check_branch
        %204 = sbr.rel (%p202) target = $region32
      $region31: #{tpu_custom_call.1} parent=5 // pred_region
        // Predicated region
        $region33: #{tpu_custom_call.1} parent=31 // pred_check
          %p205 = pneg %p38
        $region34: #{tpu_custom_call.1} parent=31 // pred_check_branch
          %207 = sbr.rel (%p205) target = $region36
        $region35: #{tpu_custom_call.1} parent=31 // pred_region
          %s208 = sand.u32 %s28, 1
          %s209 = scalar_lea.sflag [#allocation3], %s208
          %s210 = sand.u32 %s28, 1
          %s211 = smul.addr %s210, 8
          %s212 = scalar_lea.vmem [#allocation2], %s211
          %s214 = ssub.s32 128, 128
          %215 = vsyncadd %s209, %s214
          %s216 = smul.addr %s18, 128
          %s217 = scalar_lea.hbm %s0, %s216
          %s219 = sshll.u32 %s212, 4
          %s220 = int_to_ptr.vmem [resolvable:$true] %s219
          %222 = dma.hbm_to_vmem [thread:$0]  %s217, 128, %s220, %s209
        $region36: #{tpu_custom_call.1} parent=31 // pred_fallthru
          _
      $region32: #{tpu_custom_call.1} parent=5 // pred_fallthru
        _
      %p223 = scmp.le.s32.totalorder 1, %s18
      %p224 = scmp.lt.s32.totalorder %s18, 3
      %p225 = pnand %p223, %p224
      %p226 = pneg %p225
      // Predicated region
      $region37: #{tpu_custom_call.1} parent=5 // pred_check
        _
      $region38: #{tpu_custom_call.1} parent=5 // pred_check_branch
        %228 = sbr.rel (%p225) target = $region40
      $region39: #{tpu_custom_call.1} parent=5 // pred_region
        %s229 = ssub.s32 %s18, 1
        %s230 = sand.u32 %s31, 1
        %s231 = scalar_lea.sflag [#allocation3], %s230
        %s232 = sand.u32 %s31, 1
        %s233 = smul.addr %s232, 8
        %s234 = scalar_lea.vmem [#allocation2], %s233
        // Predicated region
        $region41: #{tpu_custom_call.1} parent=39 // pred_check
          %p235 = pneg %p44
        $region42: #{tpu_custom_call.1} parent=39 // pred_check_branch
          %237 = sbr.rel (%p235) target = $region44
        $region43: #{tpu_custom_call.1} parent=39 // pred_region
          %238 = dma.done %s231, 128
        $region44: #{tpu_custom_call.1} parent=39 // pred_fallthru
          _
        // Predicated region
        $region45: #{tpu_custom_call.1} parent=39 // pred_check
          %p239 = pneg %p65
        $region46: #{tpu_custom_call.1} parent=39 // pred_check_branch
          %241 = sbr.rel (%p239) target = $region48
        $region47: #{tpu_custom_call.1} parent=39 // pred_region
          %242 = dma.done [#allocation6], 4096
        $region48: #{tpu_custom_call.1} parent=39 // pred_fallthru
          _
        // Predicated region
        $region49: #{tpu_custom_call.1} parent=39 // pred_check
          %p243 = pneg %p107
        $region50: #{tpu_custom_call.1} parent=39 // pred_check_branch
          %245 = sbr.rel (%p243) target = $region52
        $region51: #{tpu_custom_call.1} parent=39 // pred_region
          %246 = dma.done [#allocation6], 4096
        $region52: #{tpu_custom_call.1} parent=39 // pred_fallthru
          _
        %s247 = sand.u32 %s31, 1
        %s248 = scalar_lea.sflag [#allocation3], %s247
        %s249 = sand.u32 %s31, 1
        %s250 = smul.addr %s249, 8
        %s251 = scalar_lea.vmem [#allocation2], %s250
        %p252 = pneg %p44
        %p253 = pneg %p41
        %p254 = pneg %p65
        %p255 = pneg %p62
        %p256 = pneg %p86
        %p257 = pneg %p83
        %p258 = pneg %p107
        %p259 = pneg %p104
        %p260 = pneg %p128
        %p261 = pneg %p125
        %p262 = pneg %p154
        %p263 = pneg %p151
        %s264 = sand.u32 %s141, 1
        %s265 = scalar_lea.sflag [#allocation4], %s264
        %s266 = sand.u32 %s141, 1
        %s267 = smul.addr %s266, 8
        %s268 = scalar_lea.vmem [#allocation8], %s267
        %v270 = vld [vmem:[%s234] sm:$0xff]
        %v271 = vpack.c.bf16 %v270, %v270
        %v272 = vld [vmem:[#allocation5] sm:$0xff]
        %v273 = vld [vmem:[#allocation5 + $0x10] sm:$0xff]
        %v274 = vld [vmem:[#allocation5 + $0x20] sm:$0xff]
        %v275 = vld [vmem:[#allocation5 + $0x30] sm:$0xff]
        %v276 = vld [vmem:[#allocation5 + $0x40] sm:$0xff]
        %v277 = vld [vmem:[#allocation5 + $0x50] sm:$0xff]
        %v278 = vld [vmem:[#allocation5 + $0x60] sm:$0xff]
        %v279 = vld [vmem:[#allocation5 + $0x70] sm:$0xff]
        %v280 = vld [vmem:[#allocation5 + $0x80] sm:$0xff]
        %v281 = vld [vmem:[#allocation5 + $0x90] sm:$0xff]
        %v282 = vld [vmem:[#allocation5 + $0xa0] sm:$0xff]
        %v283 = vld [vmem:[#allocation5 + $0xb0] sm:$0xff]
        %v284 = vld [vmem:[#allocation5 + $0xc0] sm:$0xff]
        %v285 = vld [vmem:[#allocation5 + $0xd0] sm:$0xff]
        %v286 = vld [vmem:[#allocation5 + $0xe0] sm:$0xff]
        %v287 = vld [vmem:[#allocation5 + $0xf0] sm:$0xff]
        %v288 = vld [vmem:[%s2] sm:$0x3]
        %v290 = vlaneseq
        %v291 = vshrl.u32 %v290, 7
        %v292 = vsub.s32 0, %v291
        %v293 = vrot.slane %v288, %v292
        %v294 = vlaneseq
        %v295 = vshrl.u32 %v294, 7
        %v296 = vsub.s32 1, %v295
        %v297 = vrot.slane %v288, %v296
        %v316 = vunpack.c.l.b16 %v272
        %v317 = vunpack.c.h.b16 %v272
        %v318 = vunpack.c.l.b16 %v273
        %v319 = vunpack.c.h.b16 %v273
        %v320 = vunpack.c.l.b16 %v274
        %v321 = vunpack.c.h.b16 %v274
        %v322 = vunpack.c.l.b16 %v275
        %v323 = vunpack.c.h.b16 %v275
        %v324 = vunpack.c.l.b16 %v276
        %v325 = vunpack.c.h.b16 %v276
        %v326 = vunpack.c.l.b16 %v277
        %v327 = vunpack.c.h.b16 %v277
        %v328 = vunpack.c.l.b16 %v278
        %v329 = vunpack.c.h.b16 %v278
        %v330 = vunpack.c.l.b16 %v279
        %v331 = vunpack.c.h.b16 %v279
        %v332 = vunpack.c.l.b16 %v280
        %v333 = vunpack.c.h.b16 %v280
        %v334 = vunpack.c.l.b16 %v281
        %v335 = vunpack.c.h.b16 %v281
        %v336 = vunpack.c.l.b16 %v282
        %v337 = vunpack.c.h.b16 %v282
        %v338 = vunpack.c.l.b16 %v283
        %v339 = vunpack.c.h.b16 %v283
        %v340 = vunpack.c.l.b16 %v284
        %v341 = vunpack.c.h.b16 %v284
        %v342 = vunpack.c.l.b16 %v285
        %v343 = vunpack.c.h.b16 %v285
        %v344 = vunpack.c.l.b16 %v286
        %v345 = vunpack.c.h.b16 %v286
        %v346 = vunpack.c.l.b16 %v287
        %v347 = vunpack.c.h.b16 %v287
        %v348 = vpack.c.b16 %v318, %v316
        %v349 = vpack.c.b16 %v319, %v317
        %v350 = vpack.c.b16 %v322, %v320
        %v351 = vpack.c.b16 %v323, %v321
        %v352 = vpack.c.b16 %v326, %v324
        %v353 = vpack.c.b16 %v327, %v325
        %v354 = vpack.c.b16 %v330, %v328
        %v355 = vpack.c.b16 %v331, %v329
        %v356 = vpack.c.b16 %v334, %v332
        %v357 = vpack.c.b16 %v335, %v333
        %v358 = vpack.c.b16 %v338, %v336
        %v359 = vpack.c.b16 %v339, %v337
        %v360 = vpack.c.b16 %v342, %v340
        %v361 = vpack.c.b16 %v343, %v341
        %v362 = vpack.c.b16 %v346, %v344
        %v363 = vpack.c.b16 %v347, %v345
        %380 = vmatprep.subr.bf16.mxu0 %v349
        %381 = vmatpush1.bf16.msra.mxu0 %v348
        %382 = vmatprep.subr.bf16.mxu0 %v351
        %383 = vmatpush1.bf16.msra.mxu0 %v350
        %384 = vmatprep.subr.bf16.mxu0 %v353
        %385 = vmatpush1.bf16.msra.mxu0 %v352
        %386 = vmatprep.subr.bf16.mxu0 %v355
        %387 = vmatpush1.bf16.msra.mxu0 %v354
        %388 = vmatprep.subr.bf16.mxu0 %v357
        %389 = vmatpush1.bf16.msra.mxu0 %v356
        %390 = vmatprep.subr.bf16.mxu0 %v359
        %391 = vmatpush1.bf16.msra.mxu0 %v358
        %392 = vmatprep.subr.bf16.mxu0 %v361
        %393 = vmatpush1.bf16.msra.mxu0 %v360
        %394 = vmatprep.subr.bf16.mxu0 %v363
        %395 = vmatpush1.bf16.msra.mxu0 %v362
        %396 = vmatprep.subr.bf16.mxu0 0
        %397 = vmatpush1.bf16.msra.mxu0 0
        %398 = vmatprep.subr.bf16.mxu0 0
        %399 = vmatpush1.bf16.msra.mxu0 0
        %400 = vmatprep.subr.bf16.mxu0 0
        %401 = vmatpush1.bf16.msra.mxu0 0
        %402 = vmatprep.subr.bf16.mxu0 0
        %403 = vmatpush1.bf16.msra.mxu0 0
        %404 = vmatprep.subr.bf16.mxu0 0
        %405 = vmatpush1.bf16.msra.mxu0 0
        %406 = vmatprep.subr.bf16.mxu0 0
        %407 = vmatpush1.bf16.msra.mxu0 0
        %408 = vmatprep.subr.bf16.mxu0 0
        %409 = vmatpush1.bf16.msra.mxu0 0
        %410 = vmatprep.subr.bf16.mxu0 0
        %411 = vmatpush1.bf16.msra.mxu0 0
        %412 = vmatprep.mubr.bf16.mxu0 0
        %413 = vmatmul.mubr.bf16.gmra.mrb[0].mxu0 %v271
        %v414 = vpop.f32.mrb[0].mxu0
        %v415 = vadd.f32 %v293, %v414
        %v416 = vpop.f32.mrb[0].mxu0
        %v417 = vadd.f32 %v297, %v416
        %v418 = vpop.f32.mrb[0].mxu0
        %v419 = vpop.f32.mrb[0].mxu0
        %420 = vdwg.mxu0
        %v421 = vmul.f32 %v415, 0.5
        %v422 = vmul.f32 %v417, 0.5
        %v423 = vmul.f32 %v415, 0.70710677
        %v424 = vmul.f32 %v417, 0.70710677
        %v425 = verf.f32.pop %v423
        %v426 = verf.f32.pop %v424
        %v427 = vadd.f32 %v425, 1.0
        %v428 = vadd.f32 %v426, 1.0
        %v429 = vmul.f32 %v421, %v427
        %v430 = vmul.f32 %v422, %v428
        %v431 = vld [vmem:[#allocation7] sm:$0xf]
        %v432 = vld [vmem:[#allocation7 + $0x4] sm:$0xf]
        %v433 = vld [vmem:[#allocation7 + $0x8] sm:$0xf]
        %v434 = vld [vmem:[#allocation7 + $0xc] sm:$0xf]
        %v435 = vld [vmem:[#allocation7 + $0x10] sm:$0xf]
        %v436 = vld [vmem:[#allocation7 + $0x14] sm:$0xf]
        %v437 = vld [vmem:[#allocation7 + $0x18] sm:$0xf]
        %v438 = vld [vmem:[#allocation7 + $0x1c] sm:$0xf]
        %v439 = vld [vmem:[#allocation7 + $0x20] sm:$0xf]
        %v440 = vld [vmem:[#allocation7 + $0x24] sm:$0xf]
        %v441 = vld [vmem:[#allocation7 + $0x28] sm:$0xf]
        %v442 = vld [vmem:[#allocation7 + $0x2c] sm:$0xf]
        %v443 = vld [vmem:[#allocation7 + $0x30] sm:$0xf]
        %v444 = vld [vmem:[#allocation7 + $0x34] sm:$0xf]
        %v445 = vld [vmem:[#allocation7 + $0x38] sm:$0xf]
        %v446 = vld [vmem:[#allocation7 + $0x3c] sm:$0xf]
        %v447 = vld [vmem:[#allocation7 + $0x40] sm:$0xf]
        %v448 = vld [vmem:[#allocation7 + $0x44] sm:$0xf]
        %v449 = vld [vmem:[#allocation7 + $0x48] sm:$0xf]
        %v450 = vld [vmem:[#allocation7 + $0x4c] sm:$0xf]
        %v451 = vld [vmem:[#allocation7 + $0x50] sm:$0xf]
        %v452 = vld [vmem:[#allocation7 + $0x54] sm:$0xf]
        %v453 = vld [vmem:[#allocation7 + $0x58] sm:$0xf]
        %v454 = vld [vmem:[#allocation7 + $0x5c] sm:$0xf]
        %v455 = vld [vmem:[#allocation7 + $0x60] sm:$0xf]
        %v456 = vld [vmem:[#allocation7 + $0x64] sm:$0xf]
        %v457 = vld [vmem:[#allocation7 + $0x68] sm:$0xf]
        %v458 = vld [vmem:[#allocation7 + $0x6c] sm:$0xf]
        %v459 = vld [vmem:[#allocation7 + $0x70] sm:$0xf]
        %v460 = vld [vmem:[#allocation7 + $0x74] sm:$0xf]
        %v461 = vld [vmem:[#allocation7 + $0x78] sm:$0xf]
        %v462 = vld [vmem:[#allocation7 + $0x7c] sm:$0xf]
        %v463 = vpack.c.bf16 %v429, %v429
        %v464 = vpack.c.bf16 %v430, %v430
        %v465 = vld [vmem:[#allocation5 + $0x8] sm:$0xff]
        %v466 = vld [vmem:[#allocation5 + $0x18] sm:$0xff]
        %v467 = vld [vmem:[#allocation5 + $0x28] sm:$0xff]
        %v468 = vld [vmem:[#allocation5 + $0x38] sm:$0xff]
        %v469 = vld [vmem:[#allocation5 + $0x48] sm:$0xff]
        %v470 = vld [vmem:[#allocation5 + $0x58] sm:$0xff]
        %v471 = vld [vmem:[#allocation5 + $0x68] sm:$0xff]
        %v472 = vld [vmem:[#allocation5 + $0x78] sm:$0xff]
        %v473 = vld [vmem:[#allocation5 + $0x88] sm:$0xff]
        %v474 = vld [vmem:[#allocation5 + $0x98] sm:$0xff]
        %v475 = vld [vmem:[#allocation5 + $0xa8] sm:$0xff]
        %v476 = vld [vmem:[#allocation5 + $0xb8] sm:$0xff]
        %v477 = vld [vmem:[#allocation5 + $0xc8] sm:$0xff]
        %v478 = vld [vmem:[#allocation5 + $0xd8] sm:$0xff]
        %v479 = vld [vmem:[#allocation5 + $0xe8] sm:$0xff]
        %v480 = vld [vmem:[#allocation5 + $0xf8] sm:$0xff]
        %v481 = vld [vmem:[%s2 + $0x2] sm:$0x3]
        %v483 = vlaneseq
        %v484 = vshrl.u32 %v483, 7
        %v485 = vsub.s32 0, %v484
        %v486 = vrot.slane %v481, %v485
        %v487 = vlaneseq
        %v488 = vshrl.u32 %v487, 7
        %v489 = vsub.s32 1, %v488
        %v490 = vrot.slane %v481, %v489
        %v509 = vunpack.c.l.b16 %v465
        %v510 = vunpack.c.h.b16 %v465
        %v511 = vunpack.c.l.b16 %v466
        %v512 = vunpack.c.h.b16 %v466
        %v513 = vunpack.c.l.b16 %v467
        %v514 = vunpack.c.h.b16 %v467
        %v515 = vunpack.c.l.b16 %v468
        %v516 = vunpack.c.h.b16 %v468
        %v517 = vunpack.c.l.b16 %v469
        %v518 = vunpack.c.h.b16 %v469
        %v519 = vunpack.c.l.b16 %v470
        %v520 = vunpack.c.h.b16 %v470
        %v521 = vunpack.c.l.b16 %v471
        %v522 = vunpack.c.h.b16 %v471
        %v523 = vunpack.c.l.b16 %v472
        %v524 = vunpack.c.h.b16 %v472
        %v525 = vunpack.c.l.b16 %v473
        %v526 = vunpack.c.h.b16 %v473
        %v527 = vunpack.c.l.b16 %v474
        %v528 = vunpack.c.h.b16 %v474
        %v529 = vunpack.c.l.b16 %v475
        %v530 = vunpack.c.h.b16 %v475
        %v531 = vunpack.c.l.b16 %v476
        %v532 = vunpack.c.h.b16 %v476
        %v533 = vunpack.c.l.b16 %v477
        %v534 = vunpack.c.h.b16 %v477
        %v535 = vunpack.c.l.b16 %v478
        %v536 = vunpack.c.h.b16 %v478
        %v537 = vunpack.c.l.b16 %v479
        %v538 = vunpack.c.h.b16 %v479
        %v539 = vunpack.c.l.b16 %v480
        %v540 = vunpack.c.h.b16 %v480
        %v541 = vpack.c.b16 %v511, %v509
        %v542 = vpack.c.b16 %v512, %v510
        %v543 = vpack.c.b16 %v515, %v513
        %v544 = vpack.c.b16 %v516, %v514
        %v545 = vpack.c.b16 %v519, %v517
        %v546 = vpack.c.b16 %v520, %v518
        %v547 = vpack.c.b16 %v523, %v521
        %v548 = vpack.c.b16 %v524, %v522
        %v549 = vpack.c.b16 %v527, %v525
        %v550 = vpack.c.b16 %v528, %v526
        %v551 = vpack.c.b16 %v531, %v529
        %v552 = vpack.c.b16 %v532, %v530
        %v553 = vpack.c.b16 %v535, %v533
        %v554 = vpack.c.b16 %v536, %v534
        %v555 = vpack.c.b16 %v539, %v537
        %v556 = vpack.c.b16 %v540, %v538
        %573 = vmatprep.subr.bf16.mxu0 %v542
        %574 = vmatpush1.bf16.msra.mxu0 %v541
        %575 = vmatprep.subr.bf16.mxu0 %v544
        %576 = vmatpush1.bf16.msra.mxu0 %v543
        %577 = vmatprep.subr.bf16.mxu0 %v546
        %578 = vmatpush1.bf16.msra.mxu0 %v545
        %579 = vmatprep.subr.bf16.mxu0 %v548
        %580 = vmatpush1.bf16.msra.mxu0 %v547
        %581 = vmatprep.subr.bf16.mxu0 %v550
        %582 = vmatpush1.bf16.msra.mxu0 %v549
        %583 = vmatprep.subr.bf16.mxu0 %v552
        %584 = vmatpush1.bf16.msra.mxu0 %v551
        %585 = vmatprep.subr.bf16.mxu0 %v554
        %586 = vmatpush1.bf16.msra.mxu0 %v553
        %587 = vmatprep.subr.bf16.mxu0 %v556
        %588 = vmatpush1.bf16.msra.mxu0 %v555
        %589 = vmatprep.subr.bf16.mxu0 0
        %590 = vmatpush1.bf16.msra.mxu0 0
        %591 = vmatprep.subr.bf16.mxu0 0
        %592 = vmatpush1.bf16.msra.mxu0 0
        %593 = vmatprep.subr.bf16.mxu0 0
        %594 = vmatpush1.bf16.msra.mxu0 0
        %595 = vmatprep.subr.bf16.mxu0 0
        %596 = vmatpush1.bf16.msra.mxu0 0
        %597 = vmatprep.subr.bf16.mxu0 0
        %598 = vmatpush1.bf16.msra.mxu0 0
        %599 = vmatprep.subr.bf16.mxu0 0
        %600 = vmatpush1.bf16.msra.mxu0 0
        %601 = vmatprep.subr.bf16.mxu0 0
        %602 = vmatpush1.bf16.msra.mxu0 0
        %603 = vmatprep.subr.bf16.mxu0 0
        %604 = vmatpush1.bf16.msra.mxu0 0
        %605 = vmatprep.mubr.bf16.mxu0 0
        %606 = vmatmul.mubr.bf16.gmra.mrb[0].mxu0 %v271
        %v607 = vpop.f32.mrb[0].mxu0
        %v608 = vadd.f32 %v486, %v607
        %v609 = vpop.f32.mrb[0].mxu0
        %v610 = vadd.f32 %v490, %v609
        %v611 = vpop.f32.mrb[0].mxu0
        %v612 = vpop.f32.mrb[0].mxu0
        %613 = vdwg.mxu0
        %v614 = vmul.f32 %v608, 0.5
        %v615 = vmul.f32 %v610, 0.5
        %v616 = vmul.f32 %v608, 0.70710677
        %v617 = vmul.f32 %v610, 0.70710677
        %v618 = verf.f32.pop %v616
        %v619 = verf.f32.pop %v617
        %v620 = vadd.f32 %v618, 1.0
        %v621 = vadd.f32 %v619, 1.0
        %v622 = vmul.f32 %v614, %v620
        %v623 = vmul.f32 %v615, %v621
        %v624 = vld [vmem:[#allocation7 + $0x80] sm:$0xf]
        %v625 = vld [vmem:[#allocation7 + $0x84] sm:$0xf]
        %v626 = vld [vmem:[#allocation7 + $0x88] sm:$0xf]
        %v627 = vld [vmem:[#allocation7 + $0x8c] sm:$0xf]
        %v628 = vld [vmem:[#allocation7 + $0x90] sm:$0xf]
        %v629 = vld [vmem:[#allocation7 + $0x94] sm:$0xf]
        %v630 = vld [vmem:[#allocation7 + $0x98] sm:$0xf]
        %v631 = vld [vmem:[#allocation7 + $0x9c] sm:$0xf]
        %v632 = vld [vmem:[#allocation7 + $0xa0] sm:$0xf]
        %v633 = vld [vmem:[#allocation7 + $0xa4] sm:$0xf]
        %v634 = vld [vmem:[#allocation7 + $0xa8] sm:$0xf]
        %v635 = vld [vmem:[#allocation7 + $0xac] sm:$0xf]
        %v636 = vld [vmem:[#allocation7 + $0xb0] sm:$0xf]
        %v637 = vld [vmem:[#allocation7 + $0xb4] sm:$0xf]
        %v638 = vld [vmem:[#allocation7 + $0xb8] sm:$0xf]
        %v639 = vld [vmem:[#allocation7 + $0xbc] sm:$0xf]
        %v640 = vld [vmem:[#allocation7 + $0xc0] sm:$0xf]
        %v641 = vld [vmem:[#allocation7 + $0xc4] sm:$0xf]
        %v642 = vld [vmem:[#allocation7 + $0xc8] sm:$0xf]
        %v643 = vld [vmem:[#allocation7 + $0xcc] sm:$0xf]
        %v644 = vld [vmem:[#allocation7 + $0xd0] sm:$0xf]
        %v645 = vld [vmem:[#allocation7 + $0xd4] sm:$0xf]
        %v646 = vld [vmem:[#allocation7 + $0xd8] sm:$0xf]
        %v647 = vld [vmem:[#allocation7 + $0xdc] sm:$0xf]
        %v648 = vld [vmem:[#allocation7 + $0xe0] sm:$0xf]
        %v649 = vld [vmem:[#allocation7 + $0xe4] sm:$0xf]
        %v650 = vld [vmem:[#allocation7 + $0xe8] sm:$0xf]
        %v651 = vld [vmem:[#allocation7 + $0xec] sm:$0xf]
        %v652 = vld [vmem:[#allocation7 + $0xf0] sm:$0xf]
        %v653 = vld [vmem:[#allocation7 + $0xf4] sm:$0xf]
        %v654 = vld [vmem:[#allocation7 + $0xf8] sm:$0xf]
        %v655 = vld [vmem:[#allocation7 + $0xfc] sm:$0xf]
        %v656 = vpack.c.bf16 %v622, %v622
        %v657 = vpack.c.bf16 %v623, %v623
        %v690 = vunpack.c.l.b16 %v624
        %v691 = vunpack.c.l.b16 %v625
        %v692 = vunpack.c.l.b16 %v626
        %v693 = vunpack.c.l.b16 %v627
        %v694 = vunpack.c.l.b16 %v628
        %v695 = vunpack.c.l.b16 %v629
        %v696 = vunpack.c.l.b16 %v630
        %v697 = vunpack.c.l.b16 %v631
        %v698 = vunpack.c.l.b16 %v632
        %v699 = vunpack.c.l.b16 %v633
        %v700 = vunpack.c.l.b16 %v634
        %v701 = vunpack.c.l.b16 %v635
        %v702 = vunpack.c.l.b16 %v636
        %v703 = vunpack.c.l.b16 %v637
        %v704 = vunpack.c.l.b16 %v638
        %v705 = vunpack.c.l.b16 %v639
        %v706 = vunpack.c.l.b16 %v640
        %v707 = vunpack.c.l.b16 %v641
        %v708 = vunpack.c.l.b16 %v642
        %v709 = vunpack.c.l.b16 %v643
        %v710 = vunpack.c.l.b16 %v644
        %v711 = vunpack.c.l.b16 %v645
        %v712 = vunpack.c.l.b16 %v646
        %v713 = vunpack.c.l.b16 %v647
        %v714 = vunpack.c.l.b16 %v648
        %v715 = vunpack.c.l.b16 %v649
        %v716 = vunpack.c.l.b16 %v650
        %v717 = vunpack.c.l.b16 %v651
        %v718 = vunpack.c.l.b16 %v652
        %v719 = vunpack.c.l.b16 %v653
        %v720 = vunpack.c.l.b16 %v654
        %v721 = vunpack.c.l.b16 %v655
        %v722 = vpack.c.b16 %v691, %v690
        %v723 = vpack.c.b16 %v693, %v692
        %v724 = vpack.c.b16 %v695, %v694
        %v725 = vpack.c.b16 %v697, %v696
        %v726 = vpack.c.b16 %v699, %v698
        %v727 = vpack.c.b16 %v701, %v700
        %v728 = vpack.c.b16 %v703, %v702
        %v729 = vpack.c.b16 %v705, %v704
        %v730 = vpack.c.b16 %v707, %v706
        %v731 = vpack.c.b16 %v709, %v708
        %v732 = vpack.c.b16 %v711, %v710
        %v733 = vpack.c.b16 %v713, %v712
        %v734 = vpack.c.b16 %v715, %v714
        %v735 = vpack.c.b16 %v717, %v716
        %v736 = vpack.c.b16 %v719, %v718
        %v737 = vpack.c.b16 %v721, %v720
        %754 = vmatprep.subr.bf16.mxu0 0
        %755 = vmatpush1.bf16.msra.mxu0 %v722
        %756 = vmatprep.subr.bf16.mxu0 0
        %757 = vmatpush1.bf16.msra.mxu0 %v723
        %758 = vmatprep.subr.bf16.mxu0 0
        %759 = vmatpush1.bf16.msra.mxu0 %v724
        %760 = vmatprep.subr.bf16.mxu0 0
        %761 = vmatpush1.bf16.msra.mxu0 %v725
        %762 = vmatprep.subr.bf16.mxu0 0
        %763 = vmatpush1.bf16.msra.mxu0 %v726
        %764 = vmatprep.subr.bf16.mxu0 0
        %765 = vmatpush1.bf16.msra.mxu0 %v727
        %766 = vmatprep.subr.bf16.mxu0 0
        %767 = vmatpush1.bf16.msra.mxu0 %v728
        %768 = vmatprep.subr.bf16.mxu0 0
        %769 = vmatpush1.bf16.msra.mxu0 %v729
        %770 = vmatprep.subr.bf16.mxu0 0
        %771 = vmatpush1.bf16.msra.mxu0 %v730
        %772 = vmatprep.subr.bf16.mxu0 0
        %773 = vmatpush1.bf16.msra.mxu0 %v731
        %774 = vmatprep.subr.bf16.mxu0 0
        %775 = vmatpush1.bf16.msra.mxu0 %v732
        %776 = vmatprep.subr.bf16.mxu0 0
        %777 = vmatpush1.bf16.msra.mxu0 %v733
        %778 = vmatprep.subr.bf16.mxu0 0
        %779 = vmatpush1.bf16.msra.mxu0 %v734
        %780 = vmatprep.subr.bf16.mxu0 0
        %781 = vmatpush1.bf16.msra.mxu0 %v735
        %782 = vmatprep.subr.bf16.mxu0 0
        %783 = vmatpush1.bf16.msra.mxu0 %v736
        %784 = vmatprep.subr.bf16.mxu0 0
        %785 = vmatpush1.bf16.msra.mxu0 %v737
        %786 = vmatprep.mubr.bf16.mxu0 %v657
        %787 = vmatmul.mubr.bf16.gmra.mrb[0].mxu0 %v656
        %v788 = vpop.f32.mrb[0].mxu0
        %v789 = vadd.f32 0.0, %v788
        %v790 = vpop.f32.mrb[0].mxu0
        %v791 = vpop.f32.mrb[0].mxu0
        %v792 = vpop.f32.mrb[0].mxu0
        %793 = vdwg.mxu0
        %v826 = vunpack.c.l.b16 %v431
        %v827 = vunpack.c.l.b16 %v432
        %v828 = vunpack.c.l.b16 %v433
        %v829 = vunpack.c.l.b16 %v434
        %v830 = vunpack.c.l.b16 %v435
        %v831 = vunpack.c.l.b16 %v436
        %v832 = vunpack.c.l.b16 %v437
        %v833 = vunpack.c.l.b16 %v438
        %v834 = vunpack.c.l.b16 %v439
        %v835 = vunpack.c.l.b16 %v440
        %v836 = vunpack.c.l.b16 %v441
        %v837 = vunpack.c.l.b16 %v442
        %v838 = vunpack.c.l.b16 %v443
        %v839 = vunpack.c.l.b16 %v444
        %v840 = vunpack.c.l.b16 %v445
        %v841 = vunpack.c.l.b16 %v446
        %v842 = vunpack.c.l.b16 %v447
        %v843 = vunpack.c.l.b16 %v448
        %v844 = vunpack.c.l.b16 %v449
        %v845 = vunpack.c.l.b16 %v450
        %v846 = vunpack.c.l.b16 %v451
        %v847 = vunpack.c.l.b16 %v452
        %v848 = vunpack.c.l.b16 %v453
        %v849 = vunpack.c.l.b16 %v454
        %v850 = vunpack.c.l.b16 %v455
        %v851 = vunpack.c.l.b16 %v456
        %v852 = vunpack.c.l.b16 %v457
        %v853 = vunpack.c.l.b16 %v458
        %v854 = vunpack.c.l.b16 %v459
        %v855 = vunpack.c.l.b16 %v460
        %v856 = vunpack.c.l.b16 %v461
        %v857 = vunpack.c.l.b16 %v462
        %v858 = vpack.c.b16 %v827, %v826
        %v859 = vpack.c.b16 %v829, %v828
        %v860 = vpack.c.b16 %v831, %v830
        %v861 = vpack.c.b16 %v833, %v832
        %v862 = vpack.c.b16 %v835, %v834
        %v863 = vpack.c.b16 %v837, %v836
        %v864 = vpack.c.b16 %v839, %v838
        %v865 = vpack.c.b16 %v841, %v840
        %v866 = vpack.c.b16 %v843, %v842
        %v867 = vpack.c.b16 %v845, %v844
        %v868 = vpack.c.b16 %v847, %v846
        %v869 = vpack.c.b16 %v849, %v848
        %v870 = vpack.c.b16 %v851, %v850
        %v871 = vpack.c.b16 %v853, %v852
        %v872 = vpack.c.b16 %v855, %v854
        %v873 = vpack.c.b16 %v857, %v856
        %890 = vmatprep.subr.bf16.mxu0 0
        %891 = vmatpush1.bf16.msra.mxu0 %v858
        %892 = vmatprep.subr.bf16.mxu0 0
        %893 = vmatpush1.bf16.msra.mxu0 %v859
        %894 = vmatprep.subr.bf16.mxu0 0
        %895 = vmatpush1.bf16.msra.mxu0 %v860
        %896 = vmatprep.subr.bf16.mxu0 0
        %897 = vmatpush1.bf16.msra.mxu0 %v861
        %898 = vmatprep.subr.bf16.mxu0 0
        %899 = vmatpush1.bf16.msra.mxu0 %v862
        %900 = vmatprep.subr.bf16.mxu0 0
        %901 = vmatpush1.bf16.msra.mxu0 %v863
        %902 = vmatprep.subr.bf16.mxu0 0
        %903 = vmatpush1.bf16.msra.mxu0 %v864
        %904 = vmatprep.subr.bf16.mxu0 0
        %905 = vmatpush1.bf16.msra.mxu0 %v865
        %906 = vmatprep.subr.bf16.mxu0 0
        %907 = vmatpush1.bf16.msra.mxu0 %v866
        %908 = vmatprep.subr.bf16.mxu0 0
        %909 = vmatpush1.bf16.msra.mxu0 %v867
        %910 = vmatprep.subr.bf16.mxu0 0
        %911 = vmatpush1.bf16.msra.mxu0 %v868
        %912 = vmatprep.subr.bf16.mxu0 0
        %913 = vmatpush1.bf16.msra.mxu0 %v869
        %914 = vmatprep.subr.bf16.mxu0 0
        %915 = vmatpush1.bf16.msra.mxu0 %v870
        %916 = vmatprep.subr.bf16.mxu0 0
        %917 = vmatpush1.bf16.msra.mxu0 %v871
        %918 = vmatprep.subr.bf16.mxu0 0
        %919 = vmatpush1.bf16.msra.mxu0 %v872
        %920 = vmatprep.subr.bf16.mxu0 0
        %921 = vmatpush1.bf16.msra.mxu0 %v873
        %922 = vmatprep.mubr.bf16.mxu0 %v464
        %923 = vmatmul.mubr.bf16.gmra.mrb[0].mxu0 %v463
        %v924 = vpop.f32.mrb[0].mxu0
        %v925 = vadd.f32 %v789, %v924
        %v926 = vpop.f32.mrb[0].mxu0
        %v927 = vpop.f32.mrb[0].mxu0
        %v928 = vpop.f32.mrb[0].mxu0
        %929 = vdwg.mxu0
        %v930 = vld [vmem:[%s4] sm:$0x1]
        %v932 = vlaneseq
        %v933 = vshrl.u32 %v932, 7
        %v934 = vsub.s32 0, %v933
        %v935 = vrot.slane %v930, %v934
        %v937 = vadd.f32 %v925, %v935
        %938 = vst [vmem:[%s268] sm:$0xff] %v937
        %s939 = sand.u32 %s141, 1
        %s940 = scalar_lea.sflag [#allocation4], %s939
        %s941 = sand.u32 %s141, 1
        %s942 = smul.addr %s941, 8
        %s943 = scalar_lea.vmem [#allocation8], %s942
        // Predicated region
        $region53: #{tpu_custom_call.1} parent=39 // pred_check
          %p944 = pneg %p151
        $region54: #{tpu_custom_call.1} parent=39 // pred_check_branch
          %946 = sbr.rel (%p944) target = $region56
        $region55: #{tpu_custom_call.1} parent=39 // pred_region
          %s948 = ssub.s32 128, 128
          %949 = vsyncadd %s940, %s948
          %s950 = smul.addr %s23, 128
          %s951 = scalar_lea.hbm %s5, %s950
          %s953 = sshll.u32 %s943, 4
          %s954 = int_to_ptr.vmem [resolvable:$true] %s953
          %956 = dma.vmem_to_hbm [thread:$0]  %s954, 128, %s951, %s940
        $region56: #{tpu_custom_call.1} parent=39 // pred_fallthru
          _
      $region40: #{tpu_custom_call.1} parent=5 // pred_fallthru
        _
      %p957 = scmp.le.s32.totalorder 2, %s18
      // Predicated region
      $region57: #{tpu_custom_call.1} parent=5 // pred_check
        %p958 = pneg %p957
      $region58: #{tpu_custom_call.1} parent=5 // pred_check_branch
        %960 = sbr.rel (%p958) target = $region60
      $region59: #{tpu_custom_call.1} parent=5 // pred_region
        %s961 = ssub.s32 %s18, 2
        // Predicated region
        $region61: #{tpu_custom_call.1} parent=59 // pred_check
          %p962 = pneg %p157
        $region62: #{tpu_custom_call.1} parent=59 // pred_check_branch
          %964 = sbr.rel (%p962) target = $region64
        $region63: #{tpu_custom_call.1} parent=59 // pred_region
          %s965 = sand.u32 %s142, 1
          %s966 = scalar_lea.sflag [#allocation4], %s965
          %s967 = sand.u32 %s142, 1
          %s968 = smul.addr %s967, 8
          %s969 = scalar_lea.vmem [#allocation8], %s968
          %970 = dma.done %s966, 128
        $region64: #{tpu_custom_call.1} parent=59 // pred_fallthru
          _
      $region60: #{tpu_custom_call.1} parent=5 // pred_fallthru
        _
    $region6: #{tpu_custom_call.1} parent=1 // loop_footer
      %s22 = sadd.s32 1, %s18
    $region7: #{tpu_custom_call.1} parent=1 // loop_footer_branch
      %17 = sbr.rel target = $region3
    $region8: #{tpu_custom_call.1} parent=1 // loop_exit
      _
    %971 = vsyncpa [#allocation3], 1
    %s972 = scalar_lea.sflag [#allocation3], 1
    %973 = vsyncpa %s972, 1
    %974 = vsyncpa [#allocation6], 1
    %975 = vsyncpa [#allocation4], 1
    %s976 = scalar_lea.sflag [#allocation4], 1
    %977 = vsyncpa %s976, 1

</llo_original>
